<compile_context>
chip_gen: v7x
topology: tpu7x:2x2x1
jax: 0.10.0
libtpu: 0.0.40
codegen_flags: <defaults>
</compile_context>

<pallas_src>
import jax
import jax.numpy as jnp
from jax.experimental import pallas as pl
from jax.experimental.pallas import tpu as pltpu

BN_EPS = 1e-5


def _round_up(x, m):
    return (x + m - 1) // m * m


# --------------------------------------------------------------------------- #
# Kernel
# --------------------------------------------------------------------------- #
def _mlp_kernel(x_ref, w1, b1, w2, b2, w3, b3, w4r, b4, out_ref):
    """One batch tile of the fused MLP (BN pre-folded into weights/biases).

    x_ref : (TB, K)   bf16   -- unpadded input tile
    w1    : (K, 512)  bf16,  b1: (1, 512) f32
    w2    : (512,256) bf16,  b2: (1, 256) f32
    w3    : (256,128) bf16,  b3: (1, 128) f32
    w4r   : (1, 128)  f32 (final weight column, transposed)
    b4    : (1, 1)    f32
    out   : (TB, 1)   f32
    """
    h = x_ref[...]                                                     # (TB, K) bf16

    z1 = jnp.dot(h, w1[...], preferred_element_type=jnp.float32) + b1[...]
    h1 = jnp.maximum(z1, 0.0).astype(jnp.bfloat16)                     # (TB, 512)

    z2 = jnp.dot(h1, w2[...], preferred_element_type=jnp.float32) + b2[...]
    h2 = jnp.maximum(z2, 0.0).astype(jnp.bfloat16)                     # (TB, 256)

    z3 = jnp.dot(h2, w3[...], preferred_element_type=jnp.float32) + b3[...]
    h3 = jnp.maximum(z3, 0.0)                                          # (TB, 128) f32

    # Final N=1 layer off the MXU: VPU multiply + XLU lane reduction.
    out_ref[...] = jnp.sum(h3 * w4r[...], axis=-1, keepdims=True) + b4[...]


# --------------------------------------------------------------------------- #
# Parameter folding (BN -> Linear, bf16 weights)
# --------------------------------------------------------------------------- #
def fold_params(params):
    """Fold BN into Linear, cast matmul weights to bf16, keep final layer in f32."""
    folded = {}
    for i in (1, 2, 3):
        scale = params[f"g{i}"] * jax.lax.rsqrt(params[f"v{i}"] + BN_EPS)   # (1, H)
        folded[f"w{i}"] = (params[f"w{i}"] * scale).astype(jnp.bfloat16)    # col-scale
        folded[f"b{i}"] = ((params[f"b{i}"] - params[f"m{i}"]) * scale
                           + params[f"be{i}"]).astype(jnp.float32)
    # Final layer as a (1, 128) row for the in-kernel VPU dot; kept in f32.
    folded["w4r"] = params["w4"].T.astype(jnp.float32)                      # (1, 128)
    folded["b4"] = params["b4"].astype(jnp.float32)                         # (1, 1)
    return folded


# --------------------------------------------------------------------------- #
# Wrapper
# --------------------------------------------------------------------------- #
def mlp_forward(x, fp, *, tb=512):
    """x: (B, total_input_dim) f32/bf16. fp: folded params from fold_params()."""
    B, K = x.shape
    # bf16 input -> batch tile must be a multiple of 16 (sublane packing).
    TB = min(tb, _round_up(B, 16))
    Bp = _round_up(B, TB)
    # NOTE: if B is known and large, pick TB so Bp//TB >= 2 (v7x uses both TCs)
    # and so TB divides B (avoids computing discarded padded rows).

    x_p = jnp.pad(x.astype(jnp.bfloat16), ((0, Bp - B), (0, 0)))     # no K padding

    weight_args = [fp["w1"], fp["b1"], fp["w2"], fp["b2"],
                   fp["w3"], fp["b3"], fp["w4r"], fp["b4"]]
    # Weights/biases stay resident across grid steps (same block every iteration).
    weight_specs = [pl.BlockSpec(w.shape, lambda i: (0, 0)) for w in weight_args]

    out = pl.pallas_call(
        _mlp_kernel,
        out_shape=jax.ShapeDtypeStruct((Bp, 1), jnp.float32),
        grid=(Bp // TB,),
        in_specs=[pl.BlockSpec((TB, K), lambda i: (i, 0))] + weight_specs,
        out_specs=pl.BlockSpec((TB, 1), lambda i: (i, 0)),
        compiler_params=pltpu.CompilerParams(
            dimension_semantics=("parallel",)),   # v7x: shard batch tiles over 2 TCs
    )(x_p, *weight_args)

    return out[:B]


def new_user_predictor_forward(numerical_feats, categorical_feats_dict,
                               embedding_tables, folded_params):
    """Mirrors NewUserPredictor.forward (eval mode). Gather/concat is plain-JAX glue
    fused under the same jit as the kernel; input is built once, in bf16."""
    embedded_feats = []
    for col in sorted(categorical_feats_dict.keys()):
        if col in embedding_tables:
            idx = categorical_feats_dict[col]
            embedded_feats.append(
                jnp.take(embedding_tables[col], idx, axis=0).astype(jnp.bfloat16))
    num_bf16 = numerical_feats.astype(jnp.bfloat16)
    if embedded_feats:
        combined = jnp.concatenate(embedded_feats + [num_bf16], axis=1)
    else:
        combined = num_bf16
    # TODO(synk): dropout layers are identity in eval mode (not implemented).
    return mlp_forward(combined, folded_params)


new_user_predictor_forward_jit = jax.jit(new_user_predictor_forward)


# --------------------------------------------------------------------------- #
# Synthetic params + references
# --------------------------------------------------------------------------- #
def _init_params(key, total_input_dim):
    dims = [(total_input_dim, 512), (512, 256), (256, 128), (128, 1)]
    params = {}
    k = key
    for i, (din, dout) in enumerate(dims, start=1):
        k, kw, kb = jax.random.split(k, 3)
        params[f"w{i}"] = (jax.random.normal(kw, (din, dout), jnp.float32)
                           * (1.0 / jnp.sqrt(din)))
        params[f"b{i}"] = jax.random.normal(kb, (1, dout), jnp.float32) * 0.01
        if i <= 3:  # BatchNorm layers bn1..bn3
            k, kg, kbe, km, kv = jax.random.split(k, 5)
            params[f"g{i}"] = 1.0 + 0.1 * jax.random.normal(kg, (1, dout), jnp.float32)
            params[f"be{i}"] = 0.1 * jax.random.normal(kbe, (1, dout), jnp.float32)
            params[f"m{i}"] = 0.05 * jax.random.normal(km, (1, dout), jnp.float32)
            params[f"v{i}"] = jax.random.uniform(kv, (1, dout), jnp.float32,
                                                 minval=0.5, maxval=1.5)
    return params


def _reference_f32(numerical_feats, cat_dict, emb_tables, params):
    """Full-precision unfused reference (matches the PyTorch module in eval mode)."""
    feats = [jnp.take(emb_tables[c], cat_dict[c], axis=0)
             for c in sorted(cat_dict.keys()) if c in emb_tables]
    x = jnp.concatenate(feats + [numerical_feats], axis=1)
    for i in range(1, 4):
        x = x @ params[f"w{i}"] + params[f"b{i}"]
        x = ((x - params[f"m{i}"]) * jax.lax.rsqrt(params[f"v{i}"] + BN_EPS)
             * params[f"g{i}"] + params[f"be{i}"])
        x = jnp.maximum(x, 0.0)
    return x @ params["w4"] + params["b4"]


def _reference_folded(numerical_feats, cat_dict, emb_tables, fp):
    """Pure-JAX reference doing exactly the folded bf16 math of the kernel."""
    feats = [jnp.take(emb_tables[c], cat_dict[c], axis=0).astype(jnp.bfloat16)
             for c in sorted(cat_dict.keys()) if c in emb_tables]
    x = jnp.concatenate(feats + [numerical_feats.astype(jnp.bfloat16)], axis=1)
    h = x
    for i in (1, 2, 3):
        h = jnp.maximum(jnp.dot(h, fp[f"w{i}"],
                                preferred_element_type=jnp.float32) + fp[f"b{i}"], 0.0)
        if i < 3:
            h = h.astype(jnp.bfloat16)
    return jnp.sum(h * fp["w4r"], axis=-1, keepdims=True) + fp["b4"]


if __name__ == "__main__":
    key = jax.random.PRNGKey(0)

    # Small config consistent with the module's __init__:
    num_numerical_features = 16
    embedding_dims = {"colA": (10, 8), "colB": (20, 8)}  # col -> (num_categories, embed_dim)
    total_input_dim = num_numerical_features + sum(d for _, d in embedding_dims.values())
    B = 8

    key, k_num, k_params = jax.random.split(key, 3)
    numerical_feats = jax.random.normal(k_num, (B, num_numerical_features), jnp.float32)

    emb_tables = {}
    cat_dict = {}
    for col, (ncat, edim) in embedding_dims.items():
        key, ke, ki = jax.random.split(key, 3)
        emb_tables[col] = jax.random.normal(ke, (ncat, edim), jnp.float32) * 0.1
        cat_dict[col] = jax.random.randint(ki, (B,), 0, ncat)

    params = _init_params(k_params, total_input_dim)
    folded = fold_params(params)

    out = new_user_predictor_forward_jit(numerical_feats, cat_dict, emb_tables, folded)
    out = jax.block_until_ready(out)
    assert out.shape == (B, 1), out.shape

    # Tight check vs. pure-JAX doing the same folded bf16 math.
    ref_bf16 = _reference_folded(numerical_feats, cat_dict, emb_tables, folded)
    assert jnp.allclose(out, ref_bf16, atol=2e-3, rtol=2e-3), "mismatch vs folded-bf16 reference"

    # Loose check vs. the original full-f32 unfused module math (bf16 rounding).
    ref_f32 = _reference_f32(numerical_feats, cat_dict, emb_tables, params)
    assert jnp.allclose(out, ref_f32, atol=5e-2, rtol=5e-2), "mismatch vs f32 reference"

    print("KERNEL_OK")
</pallas_src>

<mosaic_0001>
module attributes {stable_mosaic.version = 11 : i64} {
  func.func @_mlp_kernel(%arg0: i32, %arg1: memref<16x32xbf16, #tpu.memory_space<vmem>>, %arg2: memref<32x512xbf16, #tpu.memory_space<vmem>>, %arg3: memref<1x512xf32, #tpu.memory_space<vmem>>, %arg4: memref<512x256xbf16, #tpu.memory_space<vmem>>, %arg5: memref<1x256xf32, #tpu.memory_space<vmem>>, %arg6: memref<256x128xbf16, #tpu.memory_space<vmem>>, %arg7: memref<1x128xf32, #tpu.memory_space<vmem>>, %arg8: memref<1x128xf32, #tpu.memory_space<vmem>>, %arg9: memref<1x1xf32, #tpu.memory_space<vmem>>, %arg10: memref<16x1xf32, #tpu.memory_space<vmem>>) attributes {dimension_semantics = [#tpu.dimension_semantics<parallel>], iteration_bounds = array<i64: 1>, scalar_prefetch = 0 : i64, scratch_operands = 0 : i64, tpu.core_type = #tpu.core_type<tc>, window_params = [{transform_indices = @transform_0, window_bounds = array<i64: 16, 32>}, {pipeline_mode = #tpu.pipeline_mode<synchronous>, transform_indices = @transform_1, window_bounds = array<i64: 32, 512>}, {pipeline_mode = #tpu.pipeline_mode<synchronous>, transform_indices = @transform_2, window_bounds = array<i64: 1, 512>}, {pipeline_mode = #tpu.pipeline_mode<synchronous>, transform_indices = @transform_3, window_bounds = array<i64: 512, 256>}, {pipeline_mode = #tpu.pipeline_mode<synchronous>, transform_indices = @transform_4, window_bounds = array<i64: 1, 256>}, {pipeline_mode = #tpu.pipeline_mode<synchronous>, transform_indices = @transform_5, window_bounds = array<i64: 256, 128>}, {pipeline_mode = #tpu.pipeline_mode<synchronous>, transform_indices = @transform_6, window_bounds = array<i64: 1, 128>}, {pipeline_mode = #tpu.pipeline_mode<synchronous>, transform_indices = @transform_7, window_bounds = array<i64: 1, 128>}, {pipeline_mode = #tpu.pipeline_mode<synchronous>, transform_indices = @transform_8, window_bounds = array<i64: 1, 1>}, {transform_indices = @transform_9, window_bounds = array<i64: 16, 1>}]} {
    %c0 = arith.constant 0 : index
    %c0_0 = arith.constant 0 : index
    %0 = vector.load %arg1[%c0, %c0_0] : memref<16x32xbf16, #tpu.memory_space<vmem>>, vector<16x32xbf16>
    %c0_1 = arith.constant 0 : index
    %c0_2 = arith.constant 0 : index
    %1 = vector.load %arg2[%c0_1, %c0_2] : memref<32x512xbf16, #tpu.memory_space<vmem>>, vector<32x512xbf16>
    %cst = arith.constant dense<0.000000e+00> : vector<16x512xf32>
    %2 = tpu.matmul %0, %1, %cst {dimension_numbers = #tpu.dot_dimension_numbers<[1], [0], [0], [1], [0, 0, 1, 1], [], []>} : vector<16x32xbf16>, vector<32x512xbf16>, vector<16x512xf32> -> vector<16x512xf32>
    %c0_3 = arith.constant 0 : index
    %c0_4 = arith.constant 0 : index
    %3 = vector.load %arg3[%c0_3, %c0_4] : memref<1x512xf32, #tpu.memory_space<vmem>>, vector<1x512xf32>
    %4 = vector.broadcast %3 : vector<1x512xf32> to vector<16x512xf32>
    %5 = arith.addf %2, %4 : vector<16x512xf32>
    %cst_5 = arith.constant 0.000000e+00 : f32
    %6 = vector.broadcast %cst_5 : f32 to vector<16x512xf32>
    %7 = arith.maximumf %5, %6 : vector<16x512xf32>
    %8 = arith.truncf %7 : vector<16x512xf32> to vector<16x512xbf16>
    %c0_6 = arith.constant 0 : index
    %c0_7 = arith.constant 0 : index
    %9 = vector.load %arg4[%c0_6, %c0_7] : memref<512x256xbf16, #tpu.memory_space<vmem>>, vector<512x256xbf16>
    %cst_8 = arith.constant dense<0.000000e+00> : vector<16x256xf32>
    %10 = tpu.matmul %8, %9, %cst_8 {dimension_numbers = #tpu.dot_dimension_numbers<[1], [0], [0], [1], [0, 0, 1, 1], [], []>} : vector<16x512xbf16>, vector<512x256xbf16>, vector<16x256xf32> -> vector<16x256xf32>
    %c0_9 = arith.constant 0 : index
    %c0_10 = arith.constant 0 : index
    %11 = vector.load %arg5[%c0_9, %c0_10] : memref<1x256xf32, #tpu.memory_space<vmem>>, vector<1x256xf32>
    %12 = vector.broadcast %11 : vector<1x256xf32> to vector<16x256xf32>
    %13 = arith.addf %10, %12 : vector<16x256xf32>
    %cst_11 = arith.constant 0.000000e+00 : f32
    %14 = vector.broadcast %cst_11 : f32 to vector<16x256xf32>
    %15 = arith.maximumf %13, %14 : vector<16x256xf32>
    %16 = arith.truncf %15 : vector<16x256xf32> to vector<16x256xbf16>
    %c0_12 = arith.constant 0 : index
    %c0_13 = arith.constant 0 : index
    %17 = vector.load %arg6[%c0_12, %c0_13] : memref<256x128xbf16, #tpu.memory_space<vmem>>, vector<256x128xbf16>
    %cst_14 = arith.constant dense<0.000000e+00> : vector<16x128xf32>
    %18 = tpu.matmul %16, %17, %cst_14 {dimension_numbers = #tpu.dot_dimension_numbers<[1], [0], [0], [1], [0, 0, 1, 1], [], []>} : vector<16x256xbf16>, vector<256x128xbf16>, vector<16x128xf32> -> vector<16x128xf32>
    %c0_15 = arith.constant 0 : index
    %c0_16 = arith.constant 0 : index
    %19 = vector.load %arg7[%c0_15, %c0_16] : memref<1x128xf32, #tpu.memory_space<vmem>>, vector<1x128xf32>
    %20 = vector.broadcast %19 : vector<1x128xf32> to vector<16x128xf32>
    %21 = arith.addf %18, %20 : vector<16x128xf32>
    %cst_17 = arith.constant 0.000000e+00 : f32
    %22 = vector.broadcast %cst_17 : f32 to vector<16x128xf32>
    %23 = arith.maximumf %21, %22 : vector<16x128xf32>
    %c0_18 = arith.constant 0 : index
    %c0_19 = arith.constant 0 : index
    %24 = vector.load %arg8[%c0_18, %c0_19] : memref<1x128xf32, #tpu.memory_space<vmem>>, vector<1x128xf32>
    %25 = vector.broadcast %24 : vector<1x128xf32> to vector<16x128xf32>
    %26 = arith.mulf %23, %25 : vector<16x128xf32>
    %cst_20 = arith.constant dense<0.000000e+00> : vector<16xf32>
    %27 = vector.multi_reduction <add>, %26, %cst_20 [1] : vector<16x128xf32> to vector<16xf32>
    %28 = vector.shape_cast %27 : vector<16xf32> to vector<16x1xf32>
    %c0_21 = arith.constant 0 : index
    %c0_22 = arith.constant 0 : index
    %29 = vector.load %arg9[%c0_21, %c0_22] : memref<1x1xf32, #tpu.memory_space<vmem>>, vector<1x1xf32>
    %30 = vector.broadcast %29 : vector<1x1xf32> to vector<16x1xf32>
    %31 = arith.addf %28, %30 : vector<16x1xf32>
    %c0_23 = arith.constant 0 : index
    %c0_24 = arith.constant 0 : index
    %32 = vector.load %arg10[%c0_23, %c0_24] : memref<16x1xf32, #tpu.memory_space<vmem>>, vector<16x1xf32>
    tpu.vector_store %arg10[%c0_23, %c0_24], %31 {strides = array<i32>} : memref<16x1xf32, #tpu.memory_space<vmem>>, vector<16x1xf32>,
    return
  }
  func.func @transform_0(%arg0: i32) -> (i32, i32) {
    %c0_i32 = arith.constant 0 : i32
    %c0_i32_0 = arith.constant 0 : i32
    return %arg0, %c0_i32 : i32, i32
  }
  func.func @transform_1(%arg0: i32) -> (i32, i32) {
    %c0_i32 = arith.constant 0 : i32
    %c0_i32_0 = arith.constant 0 : i32
    %c0_i32_1 = arith.constant 0 : i32
    return %c0_i32, %c0_i32_0 : i32, i32
  }
  func.func @transform_2(%arg0: i32) -> (i32, i32) {
    %c0_i32 = arith.constant 0 : i32
    %c0_i32_0 = arith.constant 0 : i32
    %c0_i32_1 = arith.constant 0 : i32
    return %c0_i32, %c0_i32_0 : i32, i32
  }
  func.func @transform_3(%arg0: i32) -> (i32, i32) {
    %c0_i32 = arith.constant 0 : i32
    %c0_i32_0 = arith.constant 0 : i32
    %c0_i32_1 = arith.constant 0 : i32
    return %c0_i32, %c0_i32_0 : i32, i32
  }
  func.func @transform_4(%arg0: i32) -> (i32, i32) {
    %c0_i32 = arith.constant 0 : i32
    %c0_i32_0 = arith.constant 0 : i32
    %c0_i32_1 = arith.constant 0 : i32
    return %c0_i32, %c0_i32_0 : i32, i32
  }
  func.func @transform_5(%arg0: i32) -> (i32, i32) {
    %c0_i32 = arith.constant 0 : i32
    %c0_i32_0 = arith.constant 0 : i32
    %c0_i32_1 = arith.constant 0 : i32
    return %c0_i32, %c0_i32_0 : i32, i32
  }
  func.func @transform_6(%arg0: i32) -> (i32, i32) {
    %c0_i32 = arith.constant 0 : i32
    %c0_i32_0 = arith.constant 0 : i32
    %c0_i32_1 = arith.constant 0 : i32
    return %c0_i32, %c0_i32_0 : i32, i32
  }
  func.func @transform_7(%arg0: i32) -> (i32, i32) {
    %c0_i32 = arith.constant 0 : i32
    %c0_i32_0 = arith.constant 0 : i32
    %c0_i32_1 = arith.constant 0 : i32
    return %c0_i32, %c0_i32_0 : i32, i32
  }
  func.func @transform_8(%arg0: i32) -> (i32, i32) {
    %c0_i32 = arith.constant 0 : i32
    %c0_i32_0 = arith.constant 0 : i32
    %c0_i32_1 = arith.constant 0 : i32
    return %c0_i32, %c0_i32_0 : i32, i32
  }
  func.func @transform_9(%arg0: i32) -> (i32, i32) {
    %c0_i32 = arith.constant 0 : i32
    %c0_i32_0 = arith.constant 0 : i32
    return %arg0, %c0_i32 : i32, i32
  }
}

</mosaic_0001>

<llo_original>
// kernel: new_user_predictor_forward.1
$region0: #{new_user_predictor_forward.1}
  #allocation0 [shape = 'u32[]', space=smem, size = 0x4, offset = 0x4, fixed_abs, tag = 'smem constant byte address 0x4 - core index']
  #allocation1 [shape = 'u32[144,128]{1,0:T(1,128)}', space=vmem, size = 0x12000, scoped, tag = 'internal scratch']
  #allocation2 [shape = 'f32[1,1]{1,0:T(1,128)S(1)}', space=vmem, size = 0x200, scoped, tag = 'scoped memory for new_user_predictor_forward.1']
  %s0 = inlined_call_operand.vmem [shape: bf16[16,32], index: 0, kind: input, shape index: {}]
  %s1 = inlined_call_operand.vmem [shape: bf16[32,512], index: 1, kind: input, shape index: {}]
  %s2 = inlined_call_operand.vmem [shape: f32[1,512], index: 2, kind: input, shape index: {}]
  %s3 = inlined_call_operand.hbm [shape: bf16[512,256], index: 3, kind: input, shape index: {}]
  %s4 = inlined_call_operand.vmem [shape: f32[1,256], index: 4, kind: input, shape index: {}]
  %s5 = inlined_call_operand.vmem [shape: bf16[256,128], index: 5, kind: input, shape index: {}]
  %s6 = inlined_call_operand.vmem [shape: f32[1,128], index: 6, kind: input, shape index: {}]
  %s7 = inlined_call_operand.hbm [shape: f32[1,128], index: 7, kind: input, shape index: {}]
  %s8 = inlined_call_operand.<no memory space> [shape: f32[1,1], index: 8, kind: input, shape index: {}]
  %s9 = inlined_call_operand.vmem [shape: f32[16,1], index: 9, kind: output, shape index: {}]
  %s10 = sld [smem:[#allocation0]]
  $region54: #{new_user_predictor_forward.1} parent=0
    _
  %s12 = ssub.s32 1, %s10
  %s13 = scalar_select 0, %s12, %s10
  %v14 = vstv %s8
  %15 = vst [vmem:[#allocation2] sm:$0x1] %v14
  $region1: #{new_user_predictor_forward.1} parent=0
    #allocation3 [shape = 'u8[262144]{0}', space=vmem, size = 0x40000, scoped, tag = 'input window, operand 3, single buffered']
    #allocation4 [shape = 's32[1]{0}', space=sflag, size = 0x4, scoped, tag = 'scoped memory for new_user_predictor_forward.1']
    #allocation5 [shape = 'u8[512]{0}', space=vmem, size = 0x400, scoped, tag = 'input window, operand 7, single buffered']
    #allocation6 [shape = 's32[1]{0}', space=sflag, size = 0x4, scoped, tag = 'scoped memory for new_user_predictor_forward.1']
    %16 = vsyncpa [#allocation4], 0
    %17 = vsyncpa [#allocation6], 0
    // Predicated region
    $region2: #{new_user_predictor_forward.1} parent=1 // pred_check
      _
    $region3: #{new_user_predictor_forward.1} parent=1 // pred_check_branch
      %19 = sbr.rel (0) target = $region5
    $region4: #{new_user_predictor_forward.1} parent=1 // pred_region
      _
    $region5: #{new_user_predictor_forward.1} parent=1 // pred_fallthru
      _
    // Predicated region
    $region6: #{new_user_predictor_forward.1} parent=1 // pred_check
      _
    $region7: #{new_user_predictor_forward.1} parent=1 // pred_check_branch
      %21 = sbr.rel (0) target = $region9
    $region8: #{new_user_predictor_forward.1} parent=1 // pred_region
      _
    $region9: #{new_user_predictor_forward.1} parent=1 // pred_fallthru
      _
    // Predicated region
    $region10: #{new_user_predictor_forward.1} parent=1 // pred_check
      _
    $region11: #{new_user_predictor_forward.1} parent=1 // pred_check_branch
      %23 = sbr.rel (0) target = $region13
    $region12: #{new_user_predictor_forward.1} parent=1 // pred_region
      _
    $region13: #{new_user_predictor_forward.1} parent=1 // pred_fallthru
      _
    // Predicated region
    $region14: #{new_user_predictor_forward.1} parent=1 // pred_check
      _
    $region15: #{new_user_predictor_forward.1} parent=1 // pred_check_branch
      %25 = sbr.rel (0) target = $region17
    $region16: #{new_user_predictor_forward.1} parent=1 // pred_region
      %s27 = ssub.s32 8192, 8192
      %28 = vsyncadd [#allocation4], %s27
      %s29 = sshll.u32 [#allocation3], 4
      %s30 = int_to_ptr.vmem [resolvable:$true] %s29
      %35 = dma.hbm_to_vmem [thread:$0]  %s3, 8192, %s30, [#allocation4], 128, 128, 8
    $region17: #{new_user_predictor_forward.1} parent=1 // pred_fallthru
      _
    // Predicated region
    $region18: #{new_user_predictor_forward.1} parent=1 // pred_check
      _
    $region19: #{new_user_predictor_forward.1} parent=1 // pred_check_branch
      %37 = sbr.rel (0) target = $region21
    $region20: #{new_user_predictor_forward.1} parent=1 // pred_region
      _
    $region21: #{new_user_predictor_forward.1} parent=1 // pred_fallthru
      _
    // Predicated region
    $region22: #{new_user_predictor_forward.1} parent=1 // pred_check
      _
    $region23: #{new_user_predictor_forward.1} parent=1 // pred_check_branch
      %39 = sbr.rel (0) target = $region25
    $region24: #{new_user_predictor_forward.1} parent=1 // pred_region
      _
    $region25: #{new_user_predictor_forward.1} parent=1 // pred_fallthru
      _
    // Predicated region
    $region26: #{new_user_predictor_forward.1} parent=1 // pred_check
      _
    $region27: #{new_user_predictor_forward.1} parent=1 // pred_check_branch
      %41 = sbr.rel (0) target = $region29
    $region28: #{new_user_predictor_forward.1} parent=1 // pred_region
      _
    $region29: #{new_user_predictor_forward.1} parent=1 // pred_fallthru
      _
    // Predicated region
    $region30: #{new_user_predictor_forward.1} parent=1 // pred_check
      _
    $region31: #{new_user_predictor_forward.1} parent=1 // pred_check_branch
      %43 = sbr.rel (0) target = $region33
    $region32: #{new_user_predictor_forward.1} parent=1 // pred_region
      %s45 = ssub.s32 16, 16
      %46 = vsyncadd [#allocation6], %s45
      %s48 = sshll.u32 [#allocation5], 4
      %s49 = int_to_ptr.vmem [resolvable:$true] %s48
      %51 = dma.hbm_to_vmem [thread:$0]  %s7, 16, %s49, [#allocation6]
    $region33: #{new_user_predictor_forward.1} parent=1 // pred_fallthru
      _
    // Predicated region
    $region34: #{new_user_predictor_forward.1} parent=1 // pred_check
      _
    $region35: #{new_user_predictor_forward.1} parent=1 // pred_check_branch
      %53 = sbr.rel (0) target = $region37
    $region36: #{new_user_predictor_forward.1} parent=1 // pred_region
      _
    $region37: #{new_user_predictor_forward.1} parent=1 // pred_fallthru
      _
    // Predicated region
    $region38: #{new_user_predictor_forward.1} parent=1 // pred_check
      _
    $region39: #{new_user_predictor_forward.1} parent=1 // pred_check_branch
      %55 = sbr.rel (0) target = $region41
    $region40: #{new_user_predictor_forward.1} parent=1 // pred_region
      %56 = dma.done [#allocation4], 8192
    $region41: #{new_user_predictor_forward.1} parent=1 // pred_fallthru
      _
    // Predicated region
    $region42: #{new_user_predictor_forward.1} parent=1 // pred_check
      _
    $region43: #{new_user_predictor_forward.1} parent=1 // pred_check_branch
      %58 = sbr.rel (0) target = $region45
    $region44: #{new_user_predictor_forward.1} parent=1 // pred_region
      %59 = dma.done [#allocation6], 16
    $region45: #{new_user_predictor_forward.1} parent=1 // pred_fallthru
      _
    %v61 = vld [vmem:[%s0] sm:$0xf]
    %v62 = vld [vmem:[%s0 + $0x4] sm:$0xf]
    %v63 = vld [vmem:[%s1] sm:$0xff]
    %v64 = vld [vmem:[%s1 + $0x8] sm:$0xff]
    %v65 = vld [vmem:[%s1 + $0x10] sm:$0xff]
    %v66 = vld [vmem:[%s1 + $0x18] sm:$0xff]
    %v67 = vld [vmem:[%s1 + $0x20] sm:$0xff]
    %v68 = vld [vmem:[%s1 + $0x28] sm:$0xff]
    %v69 = vld [vmem:[%s1 + $0x30] sm:$0xff]
    %v70 = vld [vmem:[%s1 + $0x38] sm:$0xff]
    %v71 = vld [vmem:[%s2] sm:$0xf]
    %v73 = vlaneseq
    %v74 = vshrl.u32 %v73, 7
    %v75 = vsub.s32 0, %v74
    %v76 = vrot.slane %v71, %v75
    %v77 = vlaneseq
    %v78 = vshrl.u32 %v77, 7
    %v79 = vsub.s32 1, %v78
    %v80 = vrot.slane %v71, %v79
    %v81 = vlaneseq
    %v82 = vshrl.u32 %v81, 7
    %v83 = vsub.s32 2, %v82
    %v84 = vrot.slane %v71, %v83
    %v85 = vlaneseq
    %v86 = vshrl.u32 %v85, 7
    %v87 = vsub.s32 3, %v86
    %v88 = vrot.slane %v71, %v87
    %v95 = vunpack.c.l.b16 %v61
    %v96 = vunpack.c.l.b16 %v62
    %v97 = vpack.c.b16 %v96, %v95
    %v106 = vunpack.c.l.b16 %v63
    %v107 = vunpack.c.h.b16 %v63
    %v108 = vunpack.c.l.b16 %v64
    %v109 = vunpack.c.h.b16 %v64
    %v110 = vunpack.c.l.b16 %v65
    %v111 = vunpack.c.h.b16 %v65
    %v112 = vunpack.c.l.b16 %v66
    %v113 = vunpack.c.h.b16 %v66
    %v114 = vunpack.c.l.b16 %v67
    %v115 = vunpack.c.h.b16 %v67
    %v116 = vunpack.c.l.b16 %v68
    %v117 = vunpack.c.h.b16 %v68
    %v118 = vunpack.c.l.b16 %v69
    %v119 = vunpack.c.h.b16 %v69
    %v120 = vunpack.c.l.b16 %v70
    %v121 = vunpack.c.h.b16 %v70
    %v122 = vpack.c.b16 %v110, %v106
    %v123 = vpack.c.b16 %v111, %v107
    %v124 = vpack.c.b16 %v112, %v108
    %v125 = vpack.c.b16 %v113, %v109
    %v126 = vpack.c.b16 %v118, %v114
    %v127 = vpack.c.b16 %v119, %v115
    %v128 = vpack.c.b16 %v120, %v116
    %v129 = vpack.c.b16 %v121, %v117
    %vm138 = vcmask 261120
    %v140 = vsel %vm138, %v97, 0
    %142 = vmatprep.subr.bf16.mxu0 %v123
    %143 = vmatpush1.bf16.msra.mxu0 %v122
    %144 = vmatprep.subr.bf16.mxu0 %v127
    %145 = vmatpush1.bf16.msra.mxu0 %v126
    %146 = vmatprep.subr.bf16.mxu0 0
    %147 = vmatpush1.bf16.msra.mxu0 0
    %148 = vmatprep.subr.bf16.mxu0 0
    %149 = vmatpush1.bf16.msra.mxu0 0
    %150 = vmatprep.subr.bf16.mxu0 0
    %151 = vmatpush1.bf16.msra.mxu0 0
    %152 = vmatprep.subr.bf16.mxu0 0
    %153 = vmatpush1.bf16.msra.mxu0 0
    %154 = vmatprep.subr.bf16.mxu0 0
    %155 = vmatpush1.bf16.msra.mxu0 0
    %156 = vmatprep.subr.bf16.mxu0 0
    %157 = vmatpush1.bf16.msra.mxu0 0
    %158 = vmatprep.subr.bf16.mxu0 0
    %159 = vmatpush1.bf16.msra.mxu0 0
    %160 = vmatprep.subr.bf16.mxu0 0
    %161 = vmatpush1.bf16.msra.mxu0 0
    %162 = vmatprep.subr.bf16.mxu0 0
    %163 = vmatpush1.bf16.msra.mxu0 0
    %164 = vmatprep.subr.bf16.mxu0 0
    %165 = vmatpush1.bf16.msra.mxu0 0
    %166 = vmatprep.subr.bf16.mxu0 0
    %167 = vmatpush1.bf16.msra.mxu0 0
    %168 = vmatprep.subr.bf16.mxu0 0
    %169 = vmatpush1.bf16.msra.mxu0 0
    %170 = vmatprep.subr.bf16.mxu0 0
    %171 = vmatpush1.bf16.msra.mxu0 0
    %172 = vmatprep.subr.bf16.mxu0 0
    %173 = vmatpush1.bf16.msra.mxu0 0
    %174 = vmatprep.mubr.bf16.mxu0 0
    %175 = vmatmul.mubr.bf16.gmra.mrb[0].mxu0 %v140
    %v176 = vpop.f32.mrb[0].mxu0
    %v177 = vadd.f32 %v76, %v176
    %v178 = vpop.f32.mrb[0].mxu0
    %v179 = vadd.f32 %v80, %v178
    %v180 = vpop.f32.mrb[0].mxu0
    %v181 = vadd.f32 %v76, %v180
    %v182 = vpop.f32.mrb[0].mxu0
    %v183 = vadd.f32 %v80, %v182
    %184 = vdwg.mxu0
    %185 = vmatprep.subr.bf16.mxu0 %v125
    %186 = vmatpush1.bf16.msra.mxu0 %v124
    %187 = vmatprep.subr.bf16.mxu0 %v129
    %188 = vmatpush1.bf16.msra.mxu0 %v128
    %189 = vmatprep.subr.bf16.mxu0 0
    %190 = vmatpush1.bf16.msra.mxu0 0
    %191 = vmatprep.subr.bf16.mxu0 0
    %192 = vmatpush1.bf16.msra.mxu0 0
    %193 = vmatprep.subr.bf16.mxu0 0
    %194 = vmatpush1.bf16.msra.mxu0 0
    %195 = vmatprep.subr.bf16.mxu0 0
    %196 = vmatpush1.bf16.msra.mxu0 0
    %197 = vmatprep.subr.bf16.mxu0 0
    %198 = vmatpush1.bf16.msra.mxu0 0
    %199 = vmatprep.subr.bf16.mxu0 0
    %200 = vmatpush1.bf16.msra.mxu0 0
    %201 = vmatprep.subr.bf16.mxu0 0
    %202 = vmatpush1.bf16.msra.mxu0 0
    %203 = vmatprep.subr.bf16.mxu0 0
    %204 = vmatpush1.bf16.msra.mxu0 0
    %205 = vmatprep.subr.bf16.mxu0 0
    %206 = vmatpush1.bf16.msra.mxu0 0
    %207 = vmatprep.subr.bf16.mxu0 0
    %208 = vmatpush1.bf16.msra.mxu0 0
    %209 = vmatprep.subr.bf16.mxu0 0
    %210 = vmatpush1.bf16.msra.mxu0 0
    %211 = vmatprep.subr.bf16.mxu0 0
    %212 = vmatpush1.bf16.msra.mxu0 0
    %213 = vmatprep.subr.bf16.mxu0 0
    %214 = vmatpush1.bf16.msra.mxu0 0
    %215 = vmatprep.subr.bf16.mxu0 0
    %216 = vmatpush1.bf16.msra.mxu0 0
    %217 = vmatprep.mubr.bf16.mxu0 0
    %218 = vmatmul.mubr.bf16.gmra.mrb[0].mxu0 %v140
    %v219 = vpop.f32.mrb[0].mxu0
    %v220 = vadd.f32 %v84, %v219
    %v221 = vpop.f32.mrb[0].mxu0
    %v222 = vadd.f32 %v88, %v221
    %v223 = vpop.f32.mrb[0].mxu0
    %v224 = vadd.f32 %v84, %v223
    %v225 = vpop.f32.mrb[0].mxu0
    %v226 = vadd.f32 %v88, %v225
    %227 = vdwg.mxu0
    %v228 = vmax.f32 %v177, 0.0
    %v229 = vmax.f32 %v179, 0.0
    %v230 = vmax.f32 %v220, 0.0
    %v231 = vmax.f32 %v222, 0.0
    %v232 = vmax.f32 %v181, 0.0
    %v233 = vmax.f32 %v183, 0.0
    %v234 = vmax.f32 %v224, 0.0
    %v235 = vmax.f32 %v226, 0.0
    %v236 = vpack.c.bf16 %v232, %v228
    %v237 = vpack.c.bf16 %v233, %v229
    %v238 = vpack.c.bf16 %v234, %v230
    %v239 = vpack.c.bf16 %v235, %v231
    %v240 = vld [vmem:[#allocation3] sm:$0xff]
    %v241 = vld [vmem:[#allocation3 + $0x8] sm:$0xff]
    %v242 = vld [vmem:[#allocation3 + $0x10] sm:$0xff]
    %v243 = vld [vmem:[#allocation3 + $0x18] sm:$0xff]
    %v244 = vld [vmem:[#allocation3 + $0x20] sm:$0xff]
    %v245 = vld [vmem:[#allocation3 + $0x28] sm:$0xff]
    %v246 = vld [vmem:[#allocation3 + $0x30] sm:$0xff]
    %v247 = vld [vmem:[#allocation3 + $0x38] sm:$0xff]
    %v248 = vld [vmem:[#allocation3 + $0x40] sm:$0xff]
    %v249 = vld [vmem:[#allocation3 + $0x48] sm:$0xff]
    %v250 = vld [vmem:[#allocation3 + $0x50] sm:$0xff]
    %v251 = vld [vmem:[#allocation3 + $0x58] sm:$0xff]
    %v252 = vld [vmem:[#allocation3 + $0x60] sm:$0xff]
    %v253 = vld [vmem:[#allocation3 + $0x68] sm:$0xff]
    %v254 = vld [vmem:[#allocation3 + $0x70] sm:$0xff]
    %v255 = vld [vmem:[#allocation3 + $0x78] sm:$0xff]
    %v256 = vld [vmem:[#allocation3 + $0x80] sm:$0xff]
    %v257 = vld [vmem:[#allocation3 + $0x88] sm:$0xff]
    %v258 = vld [vmem:[#allocation3 + $0x90] sm:$0xff]
    %v259 = vld [vmem:[#allocation3 + $0x98] sm:$0xff]
    %v260 = vld [vmem:[#allocation3 + $0xa0] sm:$0xff]
    %v261 = vld [vmem:[#allocation3 + $0xa8] sm:$0xff]
    %v262 = vld [vmem:[#allocation3 + $0xb0] sm:$0xff]
    %v263 = vld [vmem:[#allocation3 + $0xb8] sm:$0xff]
    %v264 = vld [vmem:[#allocation3 + $0xc0] sm:$0xff]
    %v265 = vld [vmem:[#allocation3 + $0xc8] sm:$0xff]
    %v266 = vld [vmem:[#allocation3 + $0xd0] sm:$0xff]
    %v267 = vld [vmem:[#allocation3 + $0xd8] sm:$0xff]
    %v268 = vld [vmem:[#allocation3 + $0xe0] sm:$0xff]
    %v269 = vld [vmem:[#allocation3 + $0xe8] sm:$0xff]
    %v270 = vld [vmem:[#allocation3 + $0xf0] sm:$0xff]
    %v271 = vld [vmem:[#allocation3 + $0xf8] sm:$0xff]
    %v272 = vld [vmem:[#allocation3 + $0x100] sm:$0xff]
    %v273 = vld [vmem:[#allocation3 + $0x108] sm:$0xff]
    %v274 = vld [vmem:[#allocation3 + $0x110] sm:$0xff]
    %v275 = vld [vmem:[#allocation3 + $0x118] sm:$0xff]
    %v276 = vld [vmem:[#allocation3 + $0x120] sm:$0xff]
    %v277 = vld [vmem:[#allocation3 + $0x128] sm:$0xff]
    %v278 = vld [vmem:[#allocation3 + $0x130] sm:$0xff]
    %v279 = vld [vmem:[#allocation3 + $0x138] sm:$0xff]
    %v280 = vld [vmem:[#allocation3 + $0x140] sm:$0xff]
    %v281 = vld [vmem:[#allocation3 + $0x148] sm:$0xff]
    %v282 = vld [vmem:[#allocation3 + $0x150] sm:$0xff]
    %v283 = vld [vmem:[#allocation3 + $0x158] sm:$0xff]
    %v284 = vld [vmem:[#allocation3 + $0x160] sm:$0xff]
    %v285 = vld [vmem:[#allocation3 + $0x168] sm:$0xff]
    %v286 = vld [vmem:[#allocation3 + $0x170] sm:$0xff]
    %v287 = vld [vmem:[#allocation3 + $0x178] sm:$0xff]
    %v288 = vld [vmem:[#allocation3 + $0x180] sm:$0xff]
    %v289 = vld [vmem:[#allocation3 + $0x188] sm:$0xff]
    %v290 = vld [vmem:[#allocation3 + $0x190] sm:$0xff]
    %v291 = vld [vmem:[#allocation3 + $0x198] sm:$0xff]
    %v292 = vld [vmem:[#allocation3 + $0x1a0] sm:$0xff]
    %v293 = vld [vmem:[#allocation3 + $0x1a8] sm:$0xff]
    %v294 = vld [vmem:[#allocation3 + $0x1b0] sm:$0xff]
    %v295 = vld [vmem:[#allocation3 + $0x1b8] sm:$0xff]
    %v296 = vld [vmem:[#allocation3 + $0x1c0] sm:$0xff]
    %v297 = vld [vmem:[#allocation3 + $0x1c8] sm:$0xff]
    %v298 = vld [vmem:[#allocation3 + $0x1d0] sm:$0xff]
    %v299 = vld [vmem:[#allocation3 + $0x1d8] sm:$0xff]
    %v300 = vld [vmem:[#allocation3 + $0x1e0] sm:$0xff]
    %v301 = vld [vmem:[#allocation3 + $0x1e8] sm:$0xff]
    %v302 = vld [vmem:[#allocation3 + $0x1f0] sm:$0xff]
    %v303 = vld [vmem:[#allocation3 + $0x1f8] sm:$0xff]
    %v304 = vld [vmem:[%s4] sm:$0x3]
    %v306 = vlaneseq
    %v307 = vshrl.u32 %v306, 7
    %v308 = vsub.s32 0, %v307
    %v309 = vrot.slane %v304, %v308
    %v310 = vlaneseq
    %v311 = vshrl.u32 %v310, 7
    %v312 = vsub.s32 1, %v311
    %v313 = vrot.slane %v304, %v312
    %v380 = vunpack.c.l.b16 %v240
    %v381 = vunpack.c.h.b16 %v240
    %v382 = vunpack.c.l.b16 %v241
    %v383 = vunpack.c.h.b16 %v241
    %v384 = vunpack.c.l.b16 %v242
    %v385 = vunpack.c.h.b16 %v242
    %v386 = vunpack.c.l.b16 %v243
    %v387 = vunpack.c.h.b16 %v243
    %v388 = vunpack.c.l.b16 %v244
    %v389 = vunpack.c.h.b16 %v244
    %v390 = vunpack.c.l.b16 %v245
    %v391 = vunpack.c.h.b16 %v245
    %v392 = vunpack.c.l.b16 %v246
    %v393 = vunpack.c.h.b16 %v246
    %v394 = vunpack.c.l.b16 %v247
    %v395 = vunpack.c.h.b16 %v247
    %v396 = vunpack.c.l.b16 %v248
    %v397 = vunpack.c.h.b16 %v248
    %v398 = vunpack.c.l.b16 %v249
    %v399 = vunpack.c.h.b16 %v249
    %v400 = vunpack.c.l.b16 %v250
    %v401 = vunpack.c.h.b16 %v250
    %v402 = vunpack.c.l.b16 %v251
    %v403 = vunpack.c.h.b16 %v251
    %v404 = vunpack.c.l.b16 %v252
    %v405 = vunpack.c.h.b16 %v252
    %v406 = vunpack.c.l.b16 %v253
    %v407 = vunpack.c.h.b16 %v253
    %v408 = vunpack.c.l.b16 %v254
    %v409 = vunpack.c.h.b16 %v254
    %v410 = vunpack.c.l.b16 %v255
    %v411 = vunpack.c.h.b16 %v255
    %v412 = vunpack.c.l.b16 %v256
    %v413 = vunpack.c.h.b16 %v256
    %v414 = vunpack.c.l.b16 %v257
    %v415 = vunpack.c.h.b16 %v257
    %v416 = vunpack.c.l.b16 %v258
    %v417 = vunpack.c.h.b16 %v258
    %v418 = vunpack.c.l.b16 %v259
    %v419 = vunpack.c.h.b16 %v259
    %v420 = vunpack.c.l.b16 %v260
    %v421 = vunpack.c.h.b16 %v260
    %v422 = vunpack.c.l.b16 %v261
    %v423 = vunpack.c.h.b16 %v261
    %v424 = vunpack.c.l.b16 %v262
    %v425 = vunpack.c.h.b16 %v262
    %v426 = vunpack.c.l.b16 %v263
    %v427 = vunpack.c.h.b16 %v263
    %v428 = vunpack.c.l.b16 %v264
    %v429 = vunpack.c.h.b16 %v264
    %v430 = vunpack.c.l.b16 %v265
    %v431 = vunpack.c.h.b16 %v265
    %v432 = vunpack.c.l.b16 %v266
    %v433 = vunpack.c.h.b16 %v266
    %v434 = vunpack.c.l.b16 %v267
    %v435 = vunpack.c.h.b16 %v267
    %v436 = vunpack.c.l.b16 %v268
    %v437 = vunpack.c.h.b16 %v268
    %v438 = vunpack.c.l.b16 %v269
    %v439 = vunpack.c.h.b16 %v269
    %v440 = vunpack.c.l.b16 %v270
    %v441 = vunpack.c.h.b16 %v270
    %v442 = vunpack.c.l.b16 %v271
    %v443 = vunpack.c.h.b16 %v271
    %v444 = vunpack.c.l.b16 %v272
    %v445 = vunpack.c.h.b16 %v272
    %v446 = vunpack.c.l.b16 %v273
    %v447 = vunpack.c.h.b16 %v273
    %v448 = vunpack.c.l.b16 %v274
    %v449 = vunpack.c.h.b16 %v274
    %v450 = vunpack.c.l.b16 %v275
    %v451 = vunpack.c.h.b16 %v275
    %v452 = vunpack.c.l.b16 %v276
    %v453 = vunpack.c.h.b16 %v276
    %v454 = vunpack.c.l.b16 %v277
    %v455 = vunpack.c.h.b16 %v277
    %v456 = vunpack.c.l.b16 %v278
    %v457 = vunpack.c.h.b16 %v278
    %v458 = vunpack.c.l.b16 %v279
    %v459 = vunpack.c.h.b16 %v279
    %v460 = vunpack.c.l.b16 %v280
    %v461 = vunpack.c.h.b16 %v280
    %v462 = vunpack.c.l.b16 %v281
    %v463 = vunpack.c.h.b16 %v281
    %v464 = vunpack.c.l.b16 %v282
    %v465 = vunpack.c.h.b16 %v282
    %v466 = vunpack.c.l.b16 %v283
    %v467 = vunpack.c.h.b16 %v283
    %v468 = vunpack.c.l.b16 %v284
    %v469 = vunpack.c.h.b16 %v284
    %v470 = vunpack.c.l.b16 %v285
    %v471 = vunpack.c.h.b16 %v285
    %v472 = vunpack.c.l.b16 %v286
    %v473 = vunpack.c.h.b16 %v286
    %v474 = vunpack.c.l.b16 %v287
    %v475 = vunpack.c.h.b16 %v287
    %v476 = vunpack.c.l.b16 %v288
    %v477 = vunpack.c.h.b16 %v288
    %v478 = vunpack.c.l.b16 %v289
    %v479 = vunpack.c.h.b16 %v289
    %v480 = vunpack.c.l.b16 %v290
    %v481 = vunpack.c.h.b16 %v290
    %v482 = vunpack.c.l.b16 %v291
    %v483 = vunpack.c.h.b16 %v291
    %v484 = vunpack.c.l.b16 %v292
    %v485 = vunpack.c.h.b16 %v292
    %v486 = vunpack.c.l.b16 %v293
    %v487 = vunpack.c.h.b16 %v293
    %v488 = vunpack.c.l.b16 %v294
    %v489 = vunpack.c.h.b16 %v294
    %v490 = vunpack.c.l.b16 %v295
    %v491 = vunpack.c.h.b16 %v295
    %v492 = vunpack.c.l.b16 %v296
    %v493 = vunpack.c.h.b16 %v296
    %v494 = vunpack.c.l.b16 %v297
    %v495 = vunpack.c.h.b16 %v297
    %v496 = vunpack.c.l.b16 %v298
    %v497 = vunpack.c.h.b16 %v298
    %v498 = vunpack.c.l.b16 %v299
    %v499 = vunpack.c.h.b16 %v299
    %v500 = vunpack.c.l.b16 %v300
    %v501 = vunpack.c.h.b16 %v300
    %v502 = vunpack.c.l.b16 %v301
    %v503 = vunpack.c.h.b16 %v301
    %v504 = vunpack.c.l.b16 %v302
    %v505 = vunpack.c.h.b16 %v302
    %v506 = vunpack.c.l.b16 %v303
    %v507 = vunpack.c.h.b16 %v303
    %v508 = vpack.c.b16 %v382, %v380
    %v509 = vpack.c.b16 %v383, %v381
    %v510 = vpack.c.b16 %v386, %v384
    %v511 = vpack.c.b16 %v387, %v385
    %v512 = vpack.c.b16 %v390, %v388
    %v513 = vpack.c.b16 %v391, %v389
    %v514 = vpack.c.b16 %v394, %v392
    %v515 = vpack.c.b16 %v395, %v393
    %v516 = vpack.c.b16 %v398, %v396
    %v517 = vpack.c.b16 %v399, %v397
    %v518 = vpack.c.b16 %v402, %v400
    %v519 = vpack.c.b16 %v403, %v401
    %v520 = vpack.c.b16 %v406, %v404
    %v521 = vpack.c.b16 %v407, %v405
    %v522 = vpack.c.b16 %v410, %v408
    %v523 = vpack.c.b16 %v411, %v409
    %v524 = vpack.c.b16 %v414, %v412
    %v525 = vpack.c.b16 %v415, %v413
    %v526 = vpack.c.b16 %v418, %v416
    %v527 = vpack.c.b16 %v419, %v417
    %v528 = vpack.c.b16 %v422, %v420
    %v529 = vpack.c.b16 %v423, %v421
    %v530 = vpack.c.b16 %v426, %v424
    %v531 = vpack.c.b16 %v427, %v425
    %v532 = vpack.c.b16 %v430, %v428
    %v533 = vpack.c.b16 %v431, %v429
    %v534 = vpack.c.b16 %v434, %v432
    %v535 = vpack.c.b16 %v435, %v433
    %v536 = vpack.c.b16 %v438, %v436
    %v537 = vpack.c.b16 %v439, %v437
    %v538 = vpack.c.b16 %v442, %v440
    %v539 = vpack.c.b16 %v443, %v441
    %v540 = vpack.c.b16 %v446, %v444
    %v541 = vpack.c.b16 %v447, %v445
    %v542 = vpack.c.b16 %v450, %v448
    %v543 = vpack.c.b16 %v451, %v449
    %v544 = vpack.c.b16 %v454, %v452
    %v545 = vpack.c.b16 %v455, %v453
    %v546 = vpack.c.b16 %v458, %v456
    %v547 = vpack.c.b16 %v459, %v457
    %v548 = vpack.c.b16 %v462, %v460
    %v549 = vpack.c.b16 %v463, %v461
    %v550 = vpack.c.b16 %v466, %v464
    %v551 = vpack.c.b16 %v467, %v465
    %v552 = vpack.c.b16 %v470, %v468
    %v553 = vpack.c.b16 %v471, %v469
    %v554 = vpack.c.b16 %v474, %v472
    %v555 = vpack.c.b16 %v475, %v473
    %v556 = vpack.c.b16 %v478, %v476
    %v557 = vpack.c.b16 %v479, %v477
    %v558 = vpack.c.b16 %v482, %v480
    %v559 = vpack.c.b16 %v483, %v481
    %v560 = vpack.c.b16 %v486, %v484
    %v561 = vpack.c.b16 %v487, %v485
    %v562 = vpack.c.b16 %v490, %v488
    %v563 = vpack.c.b16 %v491, %v489
    %v564 = vpack.c.b16 %v494, %v492
    %v565 = vpack.c.b16 %v495, %v493
    %v566 = vpack.c.b16 %v498, %v496
    %v567 = vpack.c.b16 %v499, %v497
    %v568 = vpack.c.b16 %v502, %v500
    %v569 = vpack.c.b16 %v503, %v501
    %v570 = vpack.c.b16 %v506, %v504
    %v571 = vpack.c.b16 %v507, %v505
    %636 = vmatprep.subr.bf16.mxu0 %v509
    %637 = vmatpush1.bf16.msra.mxu0 %v508
    %638 = vmatprep.subr.bf16.mxu0 %v511
    %639 = vmatpush1.bf16.msra.mxu0 %v510
    %640 = vmatprep.subr.bf16.mxu0 %v513
    %641 = vmatpush1.bf16.msra.mxu0 %v512
    %642 = vmatprep.subr.bf16.mxu0 %v515
    %643 = vmatpush1.bf16.msra.mxu0 %v514
    %644 = vmatprep.subr.bf16.mxu0 %v517
    %645 = vmatpush1.bf16.msra.mxu0 %v516
    %646 = vmatprep.subr.bf16.mxu0 %v519
    %647 = vmatpush1.bf16.msra.mxu0 %v518
    %648 = vmatprep.subr.bf16.mxu0 %v521
    %649 = vmatpush1.bf16.msra.mxu0 %v520
    %650 = vmatprep.subr.bf16.mxu0 %v523
    %651 = vmatpush1.bf16.msra.mxu0 %v522
    %652 = vmatprep.subr.bf16.mxu0 %v525
    %653 = vmatpush1.bf16.msra.mxu0 %v524
    %654 = vmatprep.subr.bf16.mxu0 %v527
    %655 = vmatpush1.bf16.msra.mxu0 %v526
    %656 = vmatprep.subr.bf16.mxu0 %v529
    %657 = vmatpush1.bf16.msra.mxu0 %v528
    %658 = vmatprep.subr.bf16.mxu0 %v531
    %659 = vmatpush1.bf16.msra.mxu0 %v530
    %660 = vmatprep.subr.bf16.mxu0 %v533
    %661 = vmatpush1.bf16.msra.mxu0 %v532
    %662 = vmatprep.subr.bf16.mxu0 %v535
    %663 = vmatpush1.bf16.msra.mxu0 %v534
    %664 = vmatprep.subr.bf16.mxu0 %v537
    %665 = vmatpush1.bf16.msra.mxu0 %v536
    %666 = vmatprep.subr.bf16.mxu0 %v539
    %667 = vmatpush1.bf16.msra.mxu0 %v538
    %668 = vmatprep.mubr.bf16.mxu0 %v237
    %669 = vmatmul.mubr.bf16.gmra.mrb[0].mxu0 %v236
    %v670 = vpop.f32.mrb[0].mxu0
    %v671 = vadd.f32 %v309, %v670
    %v672 = vpop.f32.mrb[0].mxu0
    %v673 = vadd.f32 %v313, %v672
    %v674 = vpop.f32.mrb[0].mxu0
    %v675 = vadd.f32 %v309, %v674
    %v676 = vpop.f32.mrb[0].mxu0
    %v677 = vadd.f32 %v313, %v676
    %678 = vdwg.mxu0
    %679 = vmatprep.subr.bf16.mxu0 %v541
    %680 = vmatpush1.bf16.msra.mxu0 %v540
    %681 = vmatprep.subr.bf16.mxu0 %v543
    %682 = vmatpush1.bf16.msra.mxu0 %v542
    %683 = vmatprep.subr.bf16.mxu0 %v545
    %684 = vmatpush1.bf16.msra.mxu0 %v544
    %685 = vmatprep.subr.bf16.mxu0 %v547
    %686 = vmatpush1.bf16.msra.mxu0 %v546
    %687 = vmatprep.subr.bf16.mxu0 %v549
    %688 = vmatpush1.bf16.msra.mxu0 %v548
    %689 = vmatprep.subr.bf16.mxu0 %v551
    %690 = vmatpush1.bf16.msra.mxu0 %v550
    %691 = vmatprep.subr.bf16.mxu0 %v553
    %692 = vmatpush1.bf16.msra.mxu0 %v552
    %693 = vmatprep.subr.bf16.mxu0 %v555
    %694 = vmatpush1.bf16.msra.mxu0 %v554
    %695 = vmatprep.subr.bf16.mxu0 %v557
    %696 = vmatpush1.bf16.msra.mxu0 %v556
    %697 = vmatprep.subr.bf16.mxu0 %v559
    %698 = vmatpush1.bf16.msra.mxu0 %v558
    %699 = vmatprep.subr.bf16.mxu0 %v561
    %700 = vmatpush1.bf16.msra.mxu0 %v560
    %701 = vmatprep.subr.bf16.mxu0 %v563
    %702 = vmatpush1.bf16.msra.mxu0 %v562
    %703 = vmatprep.subr.bf16.mxu0 %v565
    %704 = vmatpush1.bf16.msra.mxu0 %v564
    %705 = vmatprep.subr.bf16.mxu0 %v567
    %706 = vmatpush1.bf16.msra.mxu0 %v566
    %707 = vmatprep.subr.bf16.mxu0 %v569
    %708 = vmatpush1.bf16.msra.mxu0 %v568
    %709 = vmatprep.subr.bf16.mxu0 %v571
    %710 = vmatpush1.bf16.msra.mxu0 %v570
    %711 = vmatprep.mubr.bf16.mxu0 %v239
    %712 = vmatmul.mubr.bf16.gmra.mrb[0].mxu0 %v238
    %v713 = vpop.f32.mrb[0].mxu0
    %v714 = vadd.f32 %v671, %v713
    %v715 = vpop.f32.mrb[0].mxu0
    %v716 = vadd.f32 %v673, %v715
    %v717 = vpop.f32.mrb[0].mxu0
    %v718 = vadd.f32 %v675, %v717
    %v719 = vpop.f32.mrb[0].mxu0
    %v720 = vadd.f32 %v677, %v719
    %721 = vdwg.mxu0
    %v722 = vmax.f32 %v714, 0.0
    %v723 = vmax.f32 %v716, 0.0
    %v724 = vmax.f32 %v718, 0.0
    %v725 = vmax.f32 %v720, 0.0
    %v726 = vpack.c.bf16 %v724, %v722
    %v727 = vpack.c.bf16 %v725, %v723
    %v728 = vld [vmem:[%s5] sm:$0xf]
    %v729 = vld [vmem:[%s5 + $0x4] sm:$0xf]
    %v730 = vld [vmem:[%s5 + $0x8] sm:$0xf]
    %v731 = vld [vmem:[%s5 + $0xc] sm:$0xf]
    %v732 = vld [vmem:[%s5 + $0x10] sm:$0xf]
    %v733 = vld [vmem:[%s5 + $0x14] sm:$0xf]
    %v734 = vld [vmem:[%s5 + $0x18] sm:$0xf]
    %v735 = vld [vmem:[%s5 + $0x1c] sm:$0xf]
    %v736 = vld [vmem:[%s5 + $0x20] sm:$0xf]
    %v737 = vld [vmem:[%s5 + $0x24] sm:$0xf]
    %v738 = vld [vmem:[%s5 + $0x28] sm:$0xf]
    %v739 = vld [vmem:[%s5 + $0x2c] sm:$0xf]
    %v740 = vld [vmem:[%s5 + $0x30] sm:$0xf]
    %v741 = vld [vmem:[%s5 + $0x34] sm:$0xf]
    %v742 = vld [vmem:[%s5 + $0x38] sm:$0xf]
    %v743 = vld [vmem:[%s5 + $0x3c] sm:$0xf]
    %v744 = vld [vmem:[%s5 + $0x40] sm:$0xf]
    %v745 = vld [vmem:[%s5 + $0x44] sm:$0xf]
    %v746 = vld [vmem:[%s5 + $0x48] sm:$0xf]
    %v747 = vld [vmem:[%s5 + $0x4c] sm:$0xf]
    %v748 = vld [vmem:[%s5 + $0x50] sm:$0xf]
    %v749 = vld [vmem:[%s5 + $0x54] sm:$0xf]
    %v750 = vld [vmem:[%s5 + $0x58] sm:$0xf]
    %v751 = vld [vmem:[%s5 + $0x5c] sm:$0xf]
    %v752 = vld [vmem:[%s5 + $0x60] sm:$0xf]
    %v753 = vld [vmem:[%s5 + $0x64] sm:$0xf]
    %v754 = vld [vmem:[%s5 + $0x68] sm:$0xf]
    %v755 = vld [vmem:[%s5 + $0x6c] sm:$0xf]
    %v756 = vld [vmem:[%s5 + $0x70] sm:$0xf]
    %v757 = vld [vmem:[%s5 + $0x74] sm:$0xf]
    %v758 = vld [vmem:[%s5 + $0x78] sm:$0xf]
    %v759 = vld [vmem:[%s5 + $0x7c] sm:$0xf]
    %v760 = vld [vmem:[%s6] sm:$0x1]
    %v762 = vlaneseq
    %v763 = vshrl.u32 %v762, 7
    %v764 = vsub.s32 0, %v763
    %v765 = vrot.slane %v760, %v764
    %v799 = vunpack.c.l.b16 %v728
    %v800 = vunpack.c.l.b16 %v729
    %v801 = vunpack.c.l.b16 %v730
    %v802 = vunpack.c.l.b16 %v731
    %v803 = vunpack.c.l.b16 %v732
    %v804 = vunpack.c.l.b16 %v733
    %v805 = vunpack.c.l.b16 %v734
    %v806 = vunpack.c.l.b16 %v735
    %v807 = vunpack.c.l.b16 %v736
    %v808 = vunpack.c.l.b16 %v737
    %v809 = vunpack.c.l.b16 %v738
    %v810 = vunpack.c.l.b16 %v739
    %v811 = vunpack.c.l.b16 %v740
    %v812 = vunpack.c.l.b16 %v741
    %v813 = vunpack.c.l.b16 %v742
    %v814 = vunpack.c.l.b16 %v743
    %v815 = vunpack.c.l.b16 %v744
    %v816 = vunpack.c.l.b16 %v745
    %v817 = vunpack.c.l.b16 %v746
    %v818 = vunpack.c.l.b16 %v747
    %v819 = vunpack.c.l.b16 %v748
    %v820 = vunpack.c.l.b16 %v749
    %v821 = vunpack.c.l.b16 %v750
    %v822 = vunpack.c.l.b16 %v751
    %v823 = vunpack.c.l.b16 %v752
    %v824 = vunpack.c.l.b16 %v753
    %v825 = vunpack.c.l.b16 %v754
    %v826 = vunpack.c.l.b16 %v755
    %v827 = vunpack.c.l.b16 %v756
    %v828 = vunpack.c.l.b16 %v757
    %v829 = vunpack.c.l.b16 %v758
    %v830 = vunpack.c.l.b16 %v759
    %v831 = vpack.c.b16 %v800, %v799
    %v832 = vpack.c.b16 %v802, %v801
    %v833 = vpack.c.b16 %v804, %v803
    %v834 = vpack.c.b16 %v806, %v805
    %v835 = vpack.c.b16 %v808, %v807
    %v836 = vpack.c.b16 %v810, %v809
    %v837 = vpack.c.b16 %v812, %v811
    %v838 = vpack.c.b16 %v814, %v813
    %v839 = vpack.c.b16 %v816, %v815
    %v840 = vpack.c.b16 %v818, %v817
    %v841 = vpack.c.b16 %v820, %v819
    %v842 = vpack.c.b16 %v822, %v821
    %v843 = vpack.c.b16 %v824, %v823
    %v844 = vpack.c.b16 %v826, %v825
    %v845 = vpack.c.b16 %v828, %v827
    %v846 = vpack.c.b16 %v830, %v829
    %863 = vmatprep.subr.bf16.mxu0 0
    %864 = vmatpush1.bf16.msra.mxu0 %v831
    %865 = vmatprep.subr.bf16.mxu0 0
    %866 = vmatpush1.bf16.msra.mxu0 %v832
    %867 = vmatprep.subr.bf16.mxu0 0
    %868 = vmatpush1.bf16.msra.mxu0 %v833
    %869 = vmatprep.subr.bf16.mxu0 0
    %870 = vmatpush1.bf16.msra.mxu0 %v834
    %871 = vmatprep.subr.bf16.mxu0 0
    %872 = vmatpush1.bf16.msra.mxu0 %v835
    %873 = vmatprep.subr.bf16.mxu0 0
    %874 = vmatpush1.bf16.msra.mxu0 %v836
    %875 = vmatprep.subr.bf16.mxu0 0
    %876 = vmatpush1.bf16.msra.mxu0 %v837
    %877 = vmatprep.subr.bf16.mxu0 0
    %878 = vmatpush1.bf16.msra.mxu0 %v838
    %879 = vmatprep.subr.bf16.mxu0 0
    %880 = vmatpush1.bf16.msra.mxu0 %v839
    %881 = vmatprep.subr.bf16.mxu0 0
    %882 = vmatpush1.bf16.msra.mxu0 %v840
    %883 = vmatprep.subr.bf16.mxu0 0
    %884 = vmatpush1.bf16.msra.mxu0 %v841
    %885 = vmatprep.subr.bf16.mxu0 0
    %886 = vmatpush1.bf16.msra.mxu0 %v842
    %887 = vmatprep.subr.bf16.mxu0 0
    %888 = vmatpush1.bf16.msra.mxu0 %v843
    %889 = vmatprep.subr.bf16.mxu0 0
    %890 = vmatpush1.bf16.msra.mxu0 %v844
    %891 = vmatprep.subr.bf16.mxu0 0
    %892 = vmatpush1.bf16.msra.mxu0 %v845
    %893 = vmatprep.subr.bf16.mxu0 0
    %894 = vmatpush1.bf16.msra.mxu0 %v846
    %895 = vmatprep.mubr.bf16.mxu0 %v727
    %896 = vmatmul.mubr.bf16.gmra.mrb[0].mxu0 %v726
    %v897 = vpop.f32.mrb[0].mxu0
    %v898 = vadd.f32 %v765, %v897
    %v899 = vpop.f32.mrb[0].mxu0
    %v900 = vpop.f32.mrb[0].mxu0
    %v901 = vadd.f32 %v765, %v900
    %v902 = vpop.f32.mrb[0].mxu0
    %903 = vdwg.mxu0
    %v904 = vmax.f32 %v898, 0.0
    %v905 = vmax.f32 %v901, 0.0
    %v906 = vld [vmem:[#allocation5] sm:$0x1]
    %v908 = vlaneseq
    %v909 = vshrl.u32 %v908, 7
    %v910 = vsub.s32 0, %v909
    %v911 = vrot.slane %v906, %v910
    %v913 = vmul.f32 %v904, %v911
    %v914 = vmul.f32 %v905, %v911
    %915 = vadd.xlane.f32.xlu0 %v913
    %v916 = vpop.xlane.xlu0 %915
    %917 = vadd.xlane.f32.xlu0 %v914
    %v918 = vpop.xlane.xlu0 %917
    %v919 = vld [vmem:[#allocation2] sm:$0x1]
    %v921 = vlaneseq
    %v922 = vshrl.u32 %v921, 7
    %v923 = vsub.s32 0, %v922
    %v924 = vrot.slane %v919, %v923
    %v926 = vadd.f32 %v916, %v924
    %v927 = vadd.f32 %v918, %v924
    %vm928 = vcmask 7168
    %929 = vst.msk [vmem:[%s9] sm:$0xff] %vm928, %v926
    %930 = vst.msk [vmem:[%s9 + $0x8] sm:$0xff] %vm928, %v927
    // Predicated region
    $region46: #{new_user_predictor_forward.1} parent=1 // pred_check
      _
    $region47: #{new_user_predictor_forward.1} parent=1 // pred_check_branch
      %932 = sbr.rel (0) target = $region49
    $region48: #{new_user_predictor_forward.1} parent=1 // pred_region
      _
    $region49: #{new_user_predictor_forward.1} parent=1 // pred_fallthru
      _
    // Predicated region
    $region50: #{new_user_predictor_forward.1} parent=1 // pred_check
      _
    $region51: #{new_user_predictor_forward.1} parent=1 // pred_check_branch
      %934 = sbr.rel (0) target = $region53
    $region52: #{new_user_predictor_forward.1} parent=1 // pred_region
      _
    $region53: #{new_user_predictor_forward.1} parent=1 // pred_fallthru
      _
    %935 = vsyncpa [#allocation4], 1
    %936 = vsyncpa [#allocation6], 1

</llo_original>
